<compile_context>
chip_gen: v5e
topology: v5e:2x2
jax: 0.10.0
libtpu: 0.0.40
codegen_flags: <defaults>
</compile_context>

<pallas_src>
import math

import jax
import jax.numpy as jnp
from jax.experimental import pallas as pl
from jax.experimental.pallas import tpu as pltpu

HIDDEN = 256


def _round_up(x: int, m: int) -> int:
    return ((x + m - 1) // m) * m


def make_actor_kernel(max_action: float, action_dim: int, sigma_col: int):
    def actor_kernel(packed_ref, w1_ref, w2_ref, b2_ref, wh_ref, bh_ref,
                     action_ref):
        # Single packed input tile: [eps | state | 1]  (f32).
        xin = packed_ref[...]
        eps = xin[:, :action_dim]                      # lane-aligned eps slice
        x = xin.astype(jnp.bfloat16)

        # l1 + relu.  Bias b1 is folded in via the trailing ones column of x;
        # the eps columns of w1 are zero so they do not feed the layer.
        a = jnp.dot(x, w1_ref[...], preferred_element_type=jnp.float32)
        a = jnp.maximum(a, 0.0).astype(jnp.bfloat16)   # fused relu + bf16 cast

        # l2 + relu
        a = jnp.dot(a, w2_ref[...], preferred_element_type=jnp.float32) + b2_ref[...]
        a = jnp.maximum(a, 0.0).astype(jnp.bfloat16)

        # Fused lane-aligned heads: mean in cols [0, ad), sigma in cols
        # [sigma_col, sigma_col + ad); the rest of the padded head is zero.
        h = jnp.dot(a, wh_ref[...], preferred_element_type=jnp.float32) + bh_ref[...]
        m = h[:, :action_dim]
        s = h[:, sigma_col:sigma_col + action_dim]

        # mean head: max_action * tanh(.)
        mean = max_action * jnp.tanh(m)
        # sigma head: numerically-stable softplus(.) + 0.001
        sigma = jnp.maximum(s, 0.0) + jnp.log1p(jnp.exp(-jnp.abs(s))) + 0.001

        # rsample + clamp
        action = mean + sigma * eps
        action_ref[...] = jnp.clip(action, -max_action, max_action)

    return actor_kernel


def actor_forward(state, kparams, eps, max_action: float, *, tile_m: int = 2048):
    """state: [B, state_dim] f32; eps: [B, action_dim] f32 standard normal.

    kparams: dict produced by prepare_kernel_params() —
      w1 : bf16 [action_dim + state_dim + 1, 256]  (eps rows zero, b1 folded)
      w2 : bf16 [256, 256],  b2 : f32 [1, 256]
      wh : bf16 [256, 2*sigma_col] lane-aligned fused head,  bh : f32 [1, 2*sigma_col]
    """
    B, state_dim = state.shape
    action_dim = eps.shape[1]
    hidden = kparams["w1"].shape[1]
    packed_dim = kparams["w1"].shape[0]
    head_n = kparams["wh"].shape[1]
    sigma_col = head_n // 2
    assert packed_dim == action_dim + state_dim + 1

    # Pack [eps | state | 1]: one input DMA stream, lane-aligned eps,
    # layer-1 bias folded into the matmul via the ones column.
    ones = jnp.ones((B, 1), state.dtype)
    packed = jnp.concatenate([eps, state, ones], axis=1)

    # Batch tile: big enough to amortize per-step overhead, but keep >=2 grid
    # steps when B allows so v7x's two TensorCores both get work.
    tm = max(8, min(tile_m, _round_up(pl.cdiv(B, 2), 8)))
    grid = (pl.cdiv(B, tm),)

    cost = pl.CostEstimate(
        flops=2 * B * (packed_dim * hidden + hidden * hidden + hidden * head_n),
        transcendentals=3 * B * action_dim,
        bytes_accessed=(B * (packed_dim + action_dim) * 4
                        + (packed_dim * hidden + hidden * hidden + hidden * head_n) * 2
                        + (hidden + head_n) * 4),
    )

    kernel = make_actor_kernel(float(max_action), action_dim, sigma_col)

    # Per-tile packed input / output move with the grid; weights & biases stay
    # VMEM-resident (constant index_map) across all batch tiles.
    in_specs = [
        pl.BlockSpec((tm, packed_dim), lambda i: (i, 0)),        # [eps|state|1]
        pl.BlockSpec((packed_dim, hidden), lambda i: (0, 0)),    # w1 (aug)
        pl.BlockSpec((hidden, hidden), lambda i: (0, 0)),        # w2
        pl.BlockSpec((1, hidden), lambda i: (0, 0)),             # b2
        pl.BlockSpec((hidden, head_n), lambda i: (0, 0)),        # wh (fused head)
        pl.BlockSpec((1, head_n), lambda i: (0, 0)),             # bh
    ]
    out_spec = pl.BlockSpec((tm, action_dim), lambda i: (i, 0))

    return pl.pallas_call(
        kernel,
        out_shape=jax.ShapeDtypeStruct((B, action_dim), jnp.float32),
        grid=grid,
        in_specs=in_specs,
        out_specs=out_spec,
        compiler_params=pltpu.CompilerParams(
            dimension_semantics=("parallel",),
            vmem_limit_bytes=32 * 1024 * 1024,
        ),
        cost_estimate=cost,
    )(packed,
      kparams["w1"], kparams["w2"], kparams["b2"],
      kparams["wh"], kparams["bh"])


def init_linear(key, fan_in, fan_out):
    """Deterministic init mimicking torch.nn.Linear default (+/- 1/sqrt(fan_in))."""
    kw, kb = jax.random.split(key)
    bound = 1.0 / math.sqrt(fan_in)
    w = jax.random.uniform(kw, (fan_in, fan_out), jnp.float32, -bound, bound)
    b = jax.random.uniform(kb, (1, fan_out), jnp.float32, -bound, bound)
    return w, b


def init_actor_params(key, state_dim, action_dim, hidden=HIDDEN):
    k1, k2, k3, k4 = jax.random.split(key, 4)
    w1, b1 = init_linear(k1, state_dim, hidden)
    w2, b2 = init_linear(k2, hidden, hidden)
    wm, bm = init_linear(k3, hidden, action_dim)
    ws, bs = init_linear(k4, hidden, action_dim)
    return {"w1": w1, "b1": b1, "w2": w2, "b2": b2,
            "wm": wm, "bm": bm, "ws": ws, "bs": bs}


def prepare_kernel_params(params, state_dim, action_dim, hidden=HIDDEN):
    """Build kernel-layout params: packed-input layer-1 weight (eps rows zero,
    b1 folded via the ones row), lane-aligned fused mean|sigma head, bf16 weights."""
    sigma_col = _round_up(max(action_dim, 1), 128)
    head_n = 2 * sigma_col

    w1_aug = jnp.concatenate([
        jnp.zeros((action_dim, hidden), jnp.float32),   # eps columns -> no effect on l1
        params["w1"],
        params["b1"],                                   # multiplies the ones column
    ], axis=0)

    wh = jnp.zeros((hidden, head_n), jnp.float32)
    wh = wh.at[:, :action_dim].set(params["wm"])
    wh = wh.at[:, sigma_col:sigma_col + action_dim].set(params["ws"])
    bh = jnp.zeros((1, head_n), jnp.float32)
    bh = bh.at[:, :action_dim].set(params["bm"])
    bh = bh.at[:, sigma_col:sigma_col + action_dim].set(params["bs"])

    return {
        "w1": w1_aug.astype(jnp.bfloat16),
        "w2": params["w2"].astype(jnp.bfloat16),
        "b2": params["b2"],
        "wh": wh.astype(jnp.bfloat16),
        "bh": bh,
    }


def actor_forward_ref(state, eps, kparams, max_action):
    """Pure-JAX reference mirroring the kernel's bf16-operand / f32-accumulate recipe."""
    action_dim = eps.shape[1]
    sigma_col = kparams["wh"].shape[1] // 2
    ones = jnp.ones((state.shape[0], 1), state.dtype)
    packed = jnp.concatenate([eps, state, ones], axis=1)

    x = packed.astype(jnp.bfloat16)
    a = jnp.dot(x, kparams["w1"], preferred_element_type=jnp.float32)
    a = jnp.maximum(a, 0.0).astype(jnp.bfloat16)
    a = jnp.dot(a, kparams["w2"], preferred_element_type=jnp.float32) + kparams["b2"]
    a = jnp.maximum(a, 0.0).astype(jnp.bfloat16)
    h = jnp.dot(a, kparams["wh"], preferred_element_type=jnp.float32) + kparams["bh"]

    mean = max_action * jnp.tanh(h[:, :action_dim])
    sigma = jax.nn.softplus(h[:, sigma_col:sigma_col + action_dim]) + 0.001
    return jnp.clip(mean + sigma * eps, -max_action, max_action)


if __name__ == "__main__":
    B, STATE_DIM, ACTION_DIM = 8, 16, 4
    MAX_ACTION = 1.0

    key = jax.random.PRNGKey(0)
    k_params, k_state, k_eps = jax.random.split(key, 3)

    params = init_actor_params(k_params, STATE_DIM, ACTION_DIM)
    kparams = prepare_kernel_params(params, STATE_DIM, ACTION_DIM)

    state = jax.random.normal(k_state, (B, STATE_DIM), jnp.float32)
    eps = jax.random.normal(k_eps, (B, ACTION_DIM), jnp.float32)  # Normal.rsample noise

    action = actor_forward(state, kparams, eps, MAX_ACTION)
    action = jax.block_until_ready(action)

    ref = actor_forward_ref(state, eps, kparams, MAX_ACTION)
    assert action.shape == (B, ACTION_DIM)
    assert bool(jnp.all(jnp.isfinite(action)))
    assert jnp.allclose(action, ref, atol=2e-3, rtol=2e-3)

    print("KERNEL_OK")
</pallas_src>

<mosaic_0001>
module attributes {stable_mosaic.version = 11 : i64} {
  func.func @actor_kernel(%arg0: i32, %arg1: memref<8x21xf32, #tpu.memory_space<vmem>>, %arg2: memref<21x256xbf16, #tpu.memory_space<vmem>>, %arg3: memref<256x256xbf16, #tpu.memory_space<vmem>>, %arg4: memref<1x256xf32, #tpu.memory_space<vmem>>, %arg5: memref<256x256xbf16, #tpu.memory_space<vmem>>, %arg6: memref<1x256xf32, #tpu.memory_space<vmem>>, %arg7: memref<8x4xf32, #tpu.memory_space<vmem>>) attributes {dimension_semantics = [#tpu.dimension_semantics<parallel>], iteration_bounds = array<i64: 1>, scalar_prefetch = 0 : i64, scratch_operands = 0 : i64, tpu.core_type = #tpu.core_type<tc>, window_params = [{transform_indices = @transform_0, window_bounds = array<i64: 8, 21>}, {pipeline_mode = #tpu.pipeline_mode<synchronous>, transform_indices = @transform_1, window_bounds = array<i64: 21, 256>}, {pipeline_mode = #tpu.pipeline_mode<synchronous>, transform_indices = @transform_2, window_bounds = array<i64: 256, 256>}, {pipeline_mode = #tpu.pipeline_mode<synchronous>, transform_indices = @transform_3, window_bounds = array<i64: 1, 256>}, {pipeline_mode = #tpu.pipeline_mode<synchronous>, transform_indices = @transform_4, window_bounds = array<i64: 256, 256>}, {pipeline_mode = #tpu.pipeline_mode<synchronous>, transform_indices = @transform_5, window_bounds = array<i64: 1, 256>}, {transform_indices = @transform_6, window_bounds = array<i64: 8, 4>}]} {
    %c0 = arith.constant 0 : index
    %c0_0 = arith.constant 0 : index
    %0 = vector.load %arg1[%c0, %c0_0] : memref<8x21xf32, #tpu.memory_space<vmem>>, vector<8x21xf32>
    %1 = vector.extract_strided_slice %0 {offsets = [0, 0], sizes = [8, 4], strides = [1, 1]} : vector<8x21xf32> to vector<8x4xf32>
    %2 = arith.truncf %0 : vector<8x21xf32> to vector<8x21xbf16>
    %c0_1 = arith.constant 0 : index
    %c0_2 = arith.constant 0 : index
    %3 = vector.load %arg2[%c0_1, %c0_2] : memref<21x256xbf16, #tpu.memory_space<vmem>>, vector<21x256xbf16>
    %cst = arith.constant dense<0.000000e+00> : vector<8x256xf32>
    %4 = tpu.matmul %2, %3, %cst {dimension_numbers = #tpu.dot_dimension_numbers<[1], [0], [0], [1], [0, 0, 1, 1], [], []>} : vector<8x21xbf16>, vector<21x256xbf16>, vector<8x256xf32> -> vector<8x256xf32>
    %cst_3 = arith.constant 0.000000e+00 : f32
    %5 = vector.broadcast %cst_3 : f32 to vector<8x256xf32>
    %6 = arith.maximumf %4, %5 : vector<8x256xf32>
    %7 = arith.truncf %6 : vector<8x256xf32> to vector<8x256xbf16>
    %c0_4 = arith.constant 0 : index
    %c0_5 = arith.constant 0 : index
    %8 = vector.load %arg3[%c0_4, %c0_5] : memref<256x256xbf16, #tpu.memory_space<vmem>>, vector<256x256xbf16>
    %cst_6 = arith.constant dense<0.000000e+00> : vector<8x256xf32>
    %9 = tpu.matmul %7, %8, %cst_6 {dimension_numbers = #tpu.dot_dimension_numbers<[1], [0], [0], [1], [0, 0, 1, 1], [], []>} : vector<8x256xbf16>, vector<256x256xbf16>, vector<8x256xf32> -> vector<8x256xf32>
    %c0_7 = arith.constant 0 : index
    %c0_8 = arith.constant 0 : index
    %10 = vector.load %arg4[%c0_7, %c0_8] : memref<1x256xf32, #tpu.memory_space<vmem>>, vector<1x256xf32>
    %11 = vector.broadcast %10 : vector<1x256xf32> to vector<8x256xf32>
    %12 = arith.addf %9, %11 : vector<8x256xf32>
    %cst_9 = arith.constant 0.000000e+00 : f32
    %13 = vector.broadcast %cst_9 : f32 to vector<8x256xf32>
    %14 = arith.maximumf %12, %13 : vector<8x256xf32>
    %15 = arith.truncf %14 : vector<8x256xf32> to vector<8x256xbf16>
    %c0_10 = arith.constant 0 : index
    %c0_11 = arith.constant 0 : index
    %16 = vector.load %arg5[%c0_10, %c0_11] : memref<256x256xbf16, #tpu.memory_space<vmem>>, vector<256x256xbf16>
    %cst_12 = arith.constant dense<0.000000e+00> : vector<8x256xf32>
    %17 = tpu.matmul %15, %16, %cst_12 {dimension_numbers = #tpu.dot_dimension_numbers<[1], [0], [0], [1], [0, 0, 1, 1], [], []>} : vector<8x256xbf16>, vector<256x256xbf16>, vector<8x256xf32> -> vector<8x256xf32>
    %c0_13 = arith.constant 0 : index
    %c0_14 = arith.constant 0 : index
    %18 = vector.load %arg6[%c0_13, %c0_14] : memref<1x256xf32, #tpu.memory_space<vmem>>, vector<1x256xf32>
    %19 = vector.broadcast %18 : vector<1x256xf32> to vector<8x256xf32>
    %20 = arith.addf %17, %19 : vector<8x256xf32>
    %21 = vector.extract_strided_slice %20 {offsets = [0, 0], sizes = [8, 4], strides = [1, 1]} : vector<8x256xf32> to vector<8x4xf32>
    %22 = vector.extract_strided_slice %20 {offsets = [0, 128], sizes = [8, 4], strides = [1, 1]} : vector<8x256xf32> to vector<8x4xf32>
    %23 = math.tanh %21 : vector<8x4xf32>
    %cst_15 = arith.constant 1.000000e+00 : f32
    %24 = vector.broadcast %cst_15 : f32 to vector<8x4xf32>
    %25 = arith.mulf %24, %23 : vector<8x4xf32>
    %cst_16 = arith.constant 0.000000e+00 : f32
    %26 = vector.broadcast %cst_16 : f32 to vector<8x4xf32>
    %27 = arith.maximumf %22, %26 : vector<8x4xf32>
    %28 = math.absf %22 : vector<8x4xf32>
    %cst_17 = arith.constant 0.000000e+00 : f32
    %29 = vector.broadcast %cst_17 : f32 to vector<8x4xf32>
    %30 = arith.subf %29, %28 : vector<8x4xf32>
    %31 = math.exp %30 : vector<8x4xf32>
    %32 = math.log1p %31 : vector<8x4xf32>
    %33 = arith.addf %27, %32 : vector<8x4xf32>
    %cst_18 = arith.constant 1.000000e-03 : f32
    %34 = vector.broadcast %cst_18 : f32 to vector<8x4xf32>
    %35 = arith.addf %33, %34 : vector<8x4xf32>
    %36 = arith.mulf %35, %1 : vector<8x4xf32>
    %37 = arith.addf %25, %36 : vector<8x4xf32>
    %cst_19 = arith.constant -1.000000e+00 : f32
    %cst_20 = arith.constant 1.000000e+00 : f32
    %38 = vector.broadcast %cst_19 : f32 to vector<8x4xf32>
    %39 = arith.maximumf %38, %37 : vector<8x4xf32>
    %40 = vector.broadcast %cst_20 : f32 to vector<8x4xf32>
    %41 = arith.minimumf %40, %39 : vector<8x4xf32>
    %c0_21 = arith.constant 0 : index
    %c0_22 = arith.constant 0 : index
    %42 = vector.load %arg7[%c0_21, %c0_22] : memref<8x4xf32, #tpu.memory_space<vmem>>, vector<8x4xf32>
    tpu.vector_store %arg7[%c0_21, %c0_22], %41 {strides = array<i32>} : memref<8x4xf32, #tpu.memory_space<vmem>>, vector<8x4xf32>,
    return
  }
  func.func @transform_0(%arg0: i32) -> (i32, i32) {
    %c0_i32 = arith.constant 0 : i32
    %c0_i32_0 = arith.constant 0 : i32
    return %arg0, %c0_i32 : i32, i32
  }
  func.func @transform_1(%arg0: i32) -> (i32, i32) {
    %c0_i32 = arith.constant 0 : i32
    %c0_i32_0 = arith.constant 0 : i32
    %c0_i32_1 = arith.constant 0 : i32
    return %c0_i32, %c0_i32_0 : i32, i32
  }
  func.func @transform_2(%arg0: i32) -> (i32, i32) {
    %c0_i32 = arith.constant 0 : i32
    %c0_i32_0 = arith.constant 0 : i32
    %c0_i32_1 = arith.constant 0 : i32
    return %c0_i32, %c0_i32_0 : i32, i32
  }
  func.func @transform_3(%arg0: i32) -> (i32, i32) {
    %c0_i32 = arith.constant 0 : i32
    %c0_i32_0 = arith.constant 0 : i32
    %c0_i32_1 = arith.constant 0 : i32
    return %c0_i32, %c0_i32_0 : i32, i32
  }
  func.func @transform_4(%arg0: i32) -> (i32, i32) {
    %c0_i32 = arith.constant 0 : i32
    %c0_i32_0 = arith.constant 0 : i32
    %c0_i32_1 = arith.constant 0 : i32
    return %c0_i32, %c0_i32_0 : i32, i32
  }
  func.func @transform_5(%arg0: i32) -> (i32, i32) {
    %c0_i32 = arith.constant 0 : i32
    %c0_i32_0 = arith.constant 0 : i32
    %c0_i32_1 = arith.constant 0 : i32
    return %c0_i32, %c0_i32_0 : i32, i32
  }
  func.func @transform_6(%arg0: i32) -> (i32, i32) {
    %c0_i32 = arith.constant 0 : i32
    %c0_i32_0 = arith.constant 0 : i32
    return %arg0, %c0_i32 : i32, i32
  }
}

</mosaic_0001>

<llo_original>
// kernel: tpu_custom_call.1
$region0: #{tpu_custom_call.1}
  #allocation0 [shape = 'u32[]', space=smem, size = 0x4, offset = 0x4, fixed_abs, tag = 'smem constant byte address 0x4 - core index']
  #allocation1 [shape = 'u32[72,128]{1,0:T(1,128)}', space=vmem, size = 0x9000, scoped, tag = 'internal scratch']
  %s0 = inlined_call_operand.hbm [shape: f32[8,21], index: 0, kind: input, shape index: {}]
  %s1 = inlined_call_operand.hbm [shape: bf16[21,256], index: 1, kind: input, shape index: {}]
  %s2 = inlined_call_operand.hbm [shape: bf16[256,256], index: 2, kind: input, shape index: {}]
  %s3 = inlined_call_operand.vmem [shape: f32[1,256], index: 3, kind: input, shape index: {}]
  %s4 = inlined_call_operand.hbm [shape: bf16[256,256], index: 4, kind: input, shape index: {}]
  %s5 = inlined_call_operand.vmem [shape: f32[1,256], index: 5, kind: input, shape index: {}]
  %s6 = inlined_call_operand.vmem [shape: f32[8,4], index: 6, kind: output, shape index: {}]
  %s7 = sld [smem:[#allocation0]]
  $region50: #{tpu_custom_call.1} parent=0
    _
  %s9 = ssub.s32 1, %s7
  %s10 = scalar_select 0, %s9, %s7
  $region1: #{tpu_custom_call.1} parent=0
    #allocation2 [shape = 'u8[4096]{0}', space=vmem, size = 0x1000, scoped, tag = 'input window, operand 0, single buffered']
    #allocation3 [shape = 's32[1]{0}', space=sflag, size = 0x4, scoped, tag = 'scoped memory for tpu_custom_call.1']
    #allocation4 [shape = 'u8[12288]{0}', space=vmem, size = 0x3000, scoped, tag = 'input window, operand 1, single buffered']
    #allocation5 [shape = 's32[1]{0}', space=sflag, size = 0x4, scoped, tag = 'scoped memory for tpu_custom_call.1']
    #allocation6 [shape = 'u8[131072]{0}', space=vmem, size = 0x20000, scoped, tag = 'input window, operand 2, single buffered']
    #allocation7 [shape = 'u8[131072]{0}', space=vmem, size = 0x20000, scoped, tag = 'input window, operand 4, single buffered']
    #allocation8 [shape = 's32[1]{0}', space=sflag, size = 0x4, scoped, tag = 'scoped memory for tpu_custom_call.1']
    %11 = vsyncpa [#allocation3], 0
    %12 = vsyncpa [#allocation5], 0
    %13 = vsyncpa [#allocation8], 0
    // Predicated region
    $region2: #{tpu_custom_call.1} parent=1 // pred_check
      _
    $region3: #{tpu_custom_call.1} parent=1 // pred_check_branch
      %15 = sbr.rel (0) target = $region5
    $region4: #{tpu_custom_call.1} parent=1 // pred_region
      %17 = vsyncadd [#allocation3], 0
      %s19 = sshll.u32 %s0, 4
      %s20 = int_to_ptr.hbm [resolvable:$true] %s19
      %s21 = sshll.u32 [#allocation2], 4
      %s22 = int_to_ptr.vmem [resolvable:$true] %s21
      %24 = dma.hbm_to_vmem [thread:$0]  %s20, 128, %s22, [#allocation3]
    $region5: #{tpu_custom_call.1} parent=1 // pred_fallthru
      _
    // Predicated region
    $region6: #{tpu_custom_call.1} parent=1 // pred_check
      _
    $region7: #{tpu_custom_call.1} parent=1 // pred_check_branch
      %26 = sbr.rel (0) target = $region9
    $region8: #{tpu_custom_call.1} parent=1 // pred_region
      %28 = vsyncadd [#allocation5], 0
      %s29 = sshll.u32 %s1, 4
      %s30 = int_to_ptr.hbm [resolvable:$true] %s29
      %s31 = sshll.u32 [#allocation4], 4
      %s32 = int_to_ptr.vmem [resolvable:$true] %s31
      %37 = dma.hbm_to_vmem [thread:$0]  %s30, 384, %s32, [#allocation5], 128, 128, 8
    $region9: #{tpu_custom_call.1} parent=1 // pred_fallthru
      _
    // Predicated region
    $region10: #{tpu_custom_call.1} parent=1 // pred_check
      _
    $region11: #{tpu_custom_call.1} parent=1 // pred_check_branch
      %39 = sbr.rel (0) target = $region13
    $region12: #{tpu_custom_call.1} parent=1 // pred_region
      %41 = vsyncadd [#allocation5], 0
      %s42 = sshll.u32 %s2, 4
      %s43 = int_to_ptr.hbm [resolvable:$true] %s42
      %s44 = sshll.u32 [#allocation6], 4
      %s45 = int_to_ptr.vmem [resolvable:$true] %s44
      %50 = dma.hbm_to_vmem [thread:$0]  %s43, 4096, %s45, [#allocation5], 128, 128, 8
    $region13: #{tpu_custom_call.1} parent=1 // pred_fallthru
      _
    // Predicated region
    $region14: #{tpu_custom_call.1} parent=1 // pred_check
      _
    $region15: #{tpu_custom_call.1} parent=1 // pred_check_branch
      %52 = sbr.rel (0) target = $region17
    $region16: #{tpu_custom_call.1} parent=1 // pred_region
      _
    $region17: #{tpu_custom_call.1} parent=1 // pred_fallthru
      _
    // Predicated region
    $region18: #{tpu_custom_call.1} parent=1 // pred_check
      _
    $region19: #{tpu_custom_call.1} parent=1 // pred_check_branch
      %54 = sbr.rel (0) target = $region21
    $region20: #{tpu_custom_call.1} parent=1 // pred_region
      %56 = vsyncadd [#allocation8], 0
      %s57 = sshll.u32 %s4, 4
      %s58 = int_to_ptr.hbm [resolvable:$true] %s57
      %s59 = sshll.u32 [#allocation7], 4
      %s60 = int_to_ptr.vmem [resolvable:$true] %s59
      %65 = dma.hbm_to_vmem [thread:$0]  %s58, 4096, %s60, [#allocation8], 128, 128, 8
    $region21: #{tpu_custom_call.1} parent=1 // pred_fallthru
      _
    // Predicated region
    $region22: #{tpu_custom_call.1} parent=1 // pred_check
      _
    $region23: #{tpu_custom_call.1} parent=1 // pred_check_branch
      %67 = sbr.rel (0) target = $region25
    $region24: #{tpu_custom_call.1} parent=1 // pred_region
      _
    $region25: #{tpu_custom_call.1} parent=1 // pred_fallthru
      _
    // Predicated region
    $region26: #{tpu_custom_call.1} parent=1 // pred_check
      _
    $region27: #{tpu_custom_call.1} parent=1 // pred_check_branch
      %69 = sbr.rel (0) target = $region29
    $region28: #{tpu_custom_call.1} parent=1 // pred_region
      %71 = dma.done [#allocation3], 128
    $region29: #{tpu_custom_call.1} parent=1 // pred_fallthru
      _
    // Predicated region
    $region30: #{tpu_custom_call.1} parent=1 // pred_check
      _
    $region31: #{tpu_custom_call.1} parent=1 // pred_check_branch
      %73 = sbr.rel (0) target = $region33
    $region32: #{tpu_custom_call.1} parent=1 // pred_region
      %75 = dma.done [#allocation5], 384
    $region33: #{tpu_custom_call.1} parent=1 // pred_fallthru
      _
    // Predicated region
    $region34: #{tpu_custom_call.1} parent=1 // pred_check
      _
    $region35: #{tpu_custom_call.1} parent=1 // pred_check_branch
      %77 = sbr.rel (0) target = $region37
    $region36: #{tpu_custom_call.1} parent=1 // pred_region
      %79 = dma.done [#allocation5], 4096
    $region37: #{tpu_custom_call.1} parent=1 // pred_fallthru
      _
    // Predicated region
    $region38: #{tpu_custom_call.1} parent=1 // pred_check
      _
    $region39: #{tpu_custom_call.1} parent=1 // pred_check_branch
      %81 = sbr.rel (0) target = $region41
    $region40: #{tpu_custom_call.1} parent=1 // pred_region
      %83 = dma.done [#allocation8], 4096
    $region41: #{tpu_custom_call.1} parent=1 // pred_fallthru
      _
    %v85 = vld [vmem:[#allocation2] sm:$0xff]
    %v86 = vpack.c.bf16 %v85, %v85
    %v87 = vld [vmem:[#allocation4] sm:$0xff]
    %v88 = vld [vmem:[#allocation4 + $0x8] sm:$0xff]
    %v89 = vld [vmem:[#allocation4 + $0x10] sm:$0x77]
    %v93 = vunpack.c.l.b16 %v87
    %v94 = vunpack.c.h.b16 %v87
    %v95 = vunpack.c.l.b16 %v88
    %v96 = vunpack.c.h.b16 %v88
    %v97 = vunpack.c.l.b16 %v89
    %v98 = vunpack.c.h.b16 %v89
    %v99 = vpack.c.b16 %v95, %v93
    %v100 = vpack.c.b16 %v96, %v94
    %v101 = vpack.c.b16 %v97, %v97
    %v102 = vpack.c.b16 %v98, %v98
    %vm105 = vcmask 171008
    %v107 = vsel %vm105, %v86, 0
    %vm109 = vcmask 1041408
    %vm110 = vcmask 1042432
    %v111 = vsel %vm109, 4294967295, 65535
    %v112 = vsel %vm110, %v111, 0
    %v114 = vand.u32 %v101, %v112
    %v117 = vand.u32 %v102, %v112
    %119 = vmatpush.bf16.msra.mxu0 0
    %120 = vmatpush.bf16.msra.mxu0 0
    %121 = vmatpush.bf16.msra.mxu0 0
    %122 = vmatpush.bf16.msra.mxu0 0
    %123 = vmatpush.bf16.msra.mxu0 0
    %124 = vmatpush.bf16.msra.mxu0 0
    %125 = vmatpush.bf16.msra.mxu0 %v114
    %126 = vmatpush.bf16.msra.mxu0 %v99
    %127 = vmatmul.bf16.gmra.mxu0 %v107
    %v128 = vpop.f32.mrf.mxu0
    %v129 = vadd.f32 0.0, %v128
    %v130 = vpop.f32.mrf.mxu0
    %131 = vdwg.mxu0
    %132 = vmatpush.bf16.msra.mxu0 0
    %133 = vmatpush.bf16.msra.mxu0 0
    %134 = vmatpush.bf16.msra.mxu0 0
    %135 = vmatpush.bf16.msra.mxu0 0
    %136 = vmatpush.bf16.msra.mxu0 0
    %137 = vmatpush.bf16.msra.mxu0 0
    %138 = vmatpush.bf16.msra.mxu0 %v117
    %139 = vmatpush.bf16.msra.mxu0 %v100
    %140 = vmatmul.bf16.gmra.mxu0 %v107
    %v141 = vpop.f32.mrf.mxu0
    %v142 = vadd.f32 0.0, %v141
    %v143 = vpop.f32.mrf.mxu0
    %144 = vdwg.mxu0
    %v145 = vmax.f32 %v129, 0.0
    %v146 = vmax.f32 %v142, 0.0
    %v147 = vpack.c.bf16 %v145, %v145
    %v148 = vpack.c.bf16 %v146, %v146
    %v149 = vld [vmem:[#allocation6] sm:$0xff]
    %v150 = vld [vmem:[#allocation6 + $0x8] sm:$0xff]
    %v151 = vld [vmem:[#allocation6 + $0x10] sm:$0xff]
    %v152 = vld [vmem:[#allocation6 + $0x18] sm:$0xff]
    %v153 = vld [vmem:[#allocation6 + $0x20] sm:$0xff]
    %v154 = vld [vmem:[#allocation6 + $0x28] sm:$0xff]
    %v155 = vld [vmem:[#allocation6 + $0x30] sm:$0xff]
    %v156 = vld [vmem:[#allocation6 + $0x38] sm:$0xff]
    %v157 = vld [vmem:[#allocation6 + $0x40] sm:$0xff]
    %v158 = vld [vmem:[#allocation6 + $0x48] sm:$0xff]
    %v159 = vld [vmem:[#allocation6 + $0x50] sm:$0xff]
    %v160 = vld [vmem:[#allocation6 + $0x58] sm:$0xff]
    %v161 = vld [vmem:[#allocation6 + $0x60] sm:$0xff]
    %v162 = vld [vmem:[#allocation6 + $0x68] sm:$0xff]
    %v163 = vld [vmem:[#allocation6 + $0x70] sm:$0xff]
    %v164 = vld [vmem:[#allocation6 + $0x78] sm:$0xff]
    %v165 = vld [vmem:[#allocation6 + $0x80] sm:$0xff]
    %v166 = vld [vmem:[#allocation6 + $0x88] sm:$0xff]
    %v167 = vld [vmem:[#allocation6 + $0x90] sm:$0xff]
    %v168 = vld [vmem:[#allocation6 + $0x98] sm:$0xff]
    %v169 = vld [vmem:[#allocation6 + $0xa0] sm:$0xff]
    %v170 = vld [vmem:[#allocation6 + $0xa8] sm:$0xff]
    %v171 = vld [vmem:[#allocation6 + $0xb0] sm:$0xff]
    %v172 = vld [vmem:[#allocation6 + $0xb8] sm:$0xff]
    %v173 = vld [vmem:[#allocation6 + $0xc0] sm:$0xff]
    %v174 = vld [vmem:[#allocation6 + $0xc8] sm:$0xff]
    %v175 = vld [vmem:[#allocation6 + $0xd0] sm:$0xff]
    %v176 = vld [vmem:[#allocation6 + $0xd8] sm:$0xff]
    %v177 = vld [vmem:[#allocation6 + $0xe0] sm:$0xff]
    %v178 = vld [vmem:[#allocation6 + $0xe8] sm:$0xff]
    %v179 = vld [vmem:[#allocation6 + $0xf0] sm:$0xff]
    %v180 = vld [vmem:[#allocation6 + $0xf8] sm:$0xff]
    %v181 = vld [vmem:[%s3] sm:$0x3]
    %v183 = vperm.slane %v181, 0
    %v184 = vperm.slane %v181, 1
    %v219 = vunpack.c.l.b16 %v149
    %v220 = vunpack.c.h.b16 %v149
    %v221 = vunpack.c.l.b16 %v150
    %v222 = vunpack.c.h.b16 %v150
    %v223 = vunpack.c.l.b16 %v151
    %v224 = vunpack.c.h.b16 %v151
    %v225 = vunpack.c.l.b16 %v152
    %v226 = vunpack.c.h.b16 %v152
    %v227 = vunpack.c.l.b16 %v153
    %v228 = vunpack.c.h.b16 %v153
    %v229 = vunpack.c.l.b16 %v154
    %v230 = vunpack.c.h.b16 %v154
    %v231 = vunpack.c.l.b16 %v155
    %v232 = vunpack.c.h.b16 %v155
    %v233 = vunpack.c.l.b16 %v156
    %v234 = vunpack.c.h.b16 %v156
    %v235 = vunpack.c.l.b16 %v157
    %v236 = vunpack.c.h.b16 %v157
    %v237 = vunpack.c.l.b16 %v158
    %v238 = vunpack.c.h.b16 %v158
    %v239 = vunpack.c.l.b16 %v159
    %v240 = vunpack.c.h.b16 %v159
    %v241 = vunpack.c.l.b16 %v160
    %v242 = vunpack.c.h.b16 %v160
    %v243 = vunpack.c.l.b16 %v161
    %v244 = vunpack.c.h.b16 %v161
    %v245 = vunpack.c.l.b16 %v162
    %v246 = vunpack.c.h.b16 %v162
    %v247 = vunpack.c.l.b16 %v163
    %v248 = vunpack.c.h.b16 %v163
    %v249 = vunpack.c.l.b16 %v164
    %v250 = vunpack.c.h.b16 %v164
    %v251 = vunpack.c.l.b16 %v165
    %v252 = vunpack.c.h.b16 %v165
    %v253 = vunpack.c.l.b16 %v166
    %v254 = vunpack.c.h.b16 %v166
    %v255 = vunpack.c.l.b16 %v167
    %v256 = vunpack.c.h.b16 %v167
    %v257 = vunpack.c.l.b16 %v168
    %v258 = vunpack.c.h.b16 %v168
    %v259 = vunpack.c.l.b16 %v169
    %v260 = vunpack.c.h.b16 %v169
    %v261 = vunpack.c.l.b16 %v170
    %v262 = vunpack.c.h.b16 %v170
    %v263 = vunpack.c.l.b16 %v171
    %v264 = vunpack.c.h.b16 %v171
    %v265 = vunpack.c.l.b16 %v172
    %v266 = vunpack.c.h.b16 %v172
    %v267 = vunpack.c.l.b16 %v173
    %v268 = vunpack.c.h.b16 %v173
    %v269 = vunpack.c.l.b16 %v174
    %v270 = vunpack.c.h.b16 %v174
    %v271 = vunpack.c.l.b16 %v175
    %v272 = vunpack.c.h.b16 %v175
    %v273 = vunpack.c.l.b16 %v176
    %v274 = vunpack.c.h.b16 %v176
    %v275 = vunpack.c.l.b16 %v177
    %v276 = vunpack.c.h.b16 %v177
    %v277 = vunpack.c.l.b16 %v178
    %v278 = vunpack.c.h.b16 %v178
    %v279 = vunpack.c.l.b16 %v179
    %v280 = vunpack.c.h.b16 %v179
    %v281 = vunpack.c.l.b16 %v180
    %v282 = vunpack.c.h.b16 %v180
    %v283 = vpack.c.b16 %v221, %v219
    %v284 = vpack.c.b16 %v222, %v220
    %v285 = vpack.c.b16 %v225, %v223
    %v286 = vpack.c.b16 %v226, %v224
    %v287 = vpack.c.b16 %v229, %v227
    %v288 = vpack.c.b16 %v230, %v228
    %v289 = vpack.c.b16 %v233, %v231
    %v290 = vpack.c.b16 %v234, %v232
    %v291 = vpack.c.b16 %v237, %v235
    %v292 = vpack.c.b16 %v238, %v236
    %v293 = vpack.c.b16 %v241, %v239
    %v294 = vpack.c.b16 %v242, %v240
    %v295 = vpack.c.b16 %v245, %v243
    %v296 = vpack.c.b16 %v246, %v244
    %v297 = vpack.c.b16 %v249, %v247
    %v298 = vpack.c.b16 %v250, %v248
    %v299 = vpack.c.b16 %v253, %v251
    %v300 = vpack.c.b16 %v254, %v252
    %v301 = vpack.c.b16 %v257, %v255
    %v302 = vpack.c.b16 %v258, %v256
    %v303 = vpack.c.b16 %v261, %v259
    %v304 = vpack.c.b16 %v262, %v260
    %v305 = vpack.c.b16 %v265, %v263
    %v306 = vpack.c.b16 %v266, %v264
    %v307 = vpack.c.b16 %v269, %v267
    %v308 = vpack.c.b16 %v270, %v268
    %v309 = vpack.c.b16 %v273, %v271
    %v310 = vpack.c.b16 %v274, %v272
    %v311 = vpack.c.b16 %v277, %v275
    %v312 = vpack.c.b16 %v278, %v276
    %v313 = vpack.c.b16 %v281, %v279
    %v314 = vpack.c.b16 %v282, %v280
    %347 = vmatpush.bf16.msra.mxu0 %v297
    %348 = vmatpush.bf16.msra.mxu0 %v295
    %349 = vmatpush.bf16.msra.mxu0 %v293
    %350 = vmatpush.bf16.msra.mxu0 %v291
    %351 = vmatpush.bf16.msra.mxu0 %v289
    %352 = vmatpush.bf16.msra.mxu0 %v287
    %353 = vmatpush.bf16.msra.mxu0 %v285
    %354 = vmatpush.bf16.msra.mxu0 %v283
    %355 = vmatmul.bf16.gmra.mxu0 %v147
    %v356 = vpop.f32.mrf.mxu0
    %v357 = vadd.f32 %v183, %v356
    %v358 = vpop.f32.mrf.mxu0
    %359 = vdwg.mxu0
    %360 = vmatpush.bf16.msra.mxu0 %v313
    %361 = vmatpush.bf16.msra.mxu0 %v311
    %362 = vmatpush.bf16.msra.mxu0 %v309
    %363 = vmatpush.bf16.msra.mxu0 %v307
    %364 = vmatpush.bf16.msra.mxu0 %v305
    %365 = vmatpush.bf16.msra.mxu0 %v303
    %366 = vmatpush.bf16.msra.mxu0 %v301
    %367 = vmatpush.bf16.msra.mxu0 %v299
    %368 = vmatmul.bf16.gmra.mxu0 %v148
    %v369 = vpop.f32.mrf.mxu0
    %v370 = vadd.f32 %v357, %v369
    %v371 = vpop.f32.mrf.mxu0
    %372 = vdwg.mxu0
    %373 = vmatpush.bf16.msra.mxu0 %v298
    %374 = vmatpush.bf16.msra.mxu0 %v296
    %375 = vmatpush.bf16.msra.mxu0 %v294
    %376 = vmatpush.bf16.msra.mxu0 %v292
    %377 = vmatpush.bf16.msra.mxu0 %v290
    %378 = vmatpush.bf16.msra.mxu0 %v288
    %379 = vmatpush.bf16.msra.mxu0 %v286
    %380 = vmatpush.bf16.msra.mxu0 %v284
    %381 = vmatmul.bf16.gmra.mxu0 %v147
    %v382 = vpop.f32.mrf.mxu0
    %v383 = vadd.f32 %v184, %v382
    %v384 = vpop.f32.mrf.mxu0
    %385 = vdwg.mxu0
    %386 = vmatpush.bf16.msra.mxu0 %v314
    %387 = vmatpush.bf16.msra.mxu0 %v312
    %388 = vmatpush.bf16.msra.mxu0 %v310
    %389 = vmatpush.bf16.msra.mxu0 %v308
    %390 = vmatpush.bf16.msra.mxu0 %v306
    %391 = vmatpush.bf16.msra.mxu0 %v304
    %392 = vmatpush.bf16.msra.mxu0 %v302
    %393 = vmatpush.bf16.msra.mxu0 %v300
    %394 = vmatmul.bf16.gmra.mxu0 %v148
    %v395 = vpop.f32.mrf.mxu0
    %v396 = vadd.f32 %v383, %v395
    %v397 = vpop.f32.mrf.mxu0
    %398 = vdwg.mxu0
    %v399 = vmax.f32 %v370, 0.0
    %v400 = vmax.f32 %v396, 0.0
    %v401 = vpack.c.bf16 %v399, %v399
    %v402 = vpack.c.bf16 %v400, %v400
    %v403 = vld [vmem:[#allocation7] sm:$0xff]
    %v404 = vld [vmem:[#allocation7 + $0x8] sm:$0xff]
    %v405 = vld [vmem:[#allocation7 + $0x10] sm:$0xff]
    %v406 = vld [vmem:[#allocation7 + $0x18] sm:$0xff]
    %v407 = vld [vmem:[#allocation7 + $0x20] sm:$0xff]
    %v408 = vld [vmem:[#allocation7 + $0x28] sm:$0xff]
    %v409 = vld [vmem:[#allocation7 + $0x30] sm:$0xff]
    %v410 = vld [vmem:[#allocation7 + $0x38] sm:$0xff]
    %v411 = vld [vmem:[#allocation7 + $0x40] sm:$0xff]
    %v412 = vld [vmem:[#allocation7 + $0x48] sm:$0xff]
    %v413 = vld [vmem:[#allocation7 + $0x50] sm:$0xff]
    %v414 = vld [vmem:[#allocation7 + $0x58] sm:$0xff]
    %v415 = vld [vmem:[#allocation7 + $0x60] sm:$0xff]
    %v416 = vld [vmem:[#allocation7 + $0x68] sm:$0xff]
    %v417 = vld [vmem:[#allocation7 + $0x70] sm:$0xff]
    %v418 = vld [vmem:[#allocation7 + $0x78] sm:$0xff]
    %v419 = vld [vmem:[#allocation7 + $0x80] sm:$0xff]
    %v420 = vld [vmem:[#allocation7 + $0x88] sm:$0xff]
    %v421 = vld [vmem:[#allocation7 + $0x90] sm:$0xff]
    %v422 = vld [vmem:[#allocation7 + $0x98] sm:$0xff]
    %v423 = vld [vmem:[#allocation7 + $0xa0] sm:$0xff]
    %v424 = vld [vmem:[#allocation7 + $0xa8] sm:$0xff]
    %v425 = vld [vmem:[#allocation7 + $0xb0] sm:$0xff]
    %v426 = vld [vmem:[#allocation7 + $0xb8] sm:$0xff]
    %v427 = vld [vmem:[#allocation7 + $0xc0] sm:$0xff]
    %v428 = vld [vmem:[#allocation7 + $0xc8] sm:$0xff]
    %v429 = vld [vmem:[#allocation7 + $0xd0] sm:$0xff]
    %v430 = vld [vmem:[#allocation7 + $0xd8] sm:$0xff]
    %v431 = vld [vmem:[#allocation7 + $0xe0] sm:$0xff]
    %v432 = vld [vmem:[#allocation7 + $0xe8] sm:$0xff]
    %v433 = vld [vmem:[#allocation7 + $0xf0] sm:$0xff]
    %v434 = vld [vmem:[#allocation7 + $0xf8] sm:$0xff]
    %v435 = vld [vmem:[%s5] sm:$0x3]
    %v437 = vperm.slane %v435, 0
    %v438 = vperm.slane %v435, 1
    %v473 = vunpack.c.l.b16 %v403
    %v474 = vunpack.c.h.b16 %v403
    %v475 = vunpack.c.l.b16 %v404
    %v476 = vunpack.c.h.b16 %v404
    %v477 = vunpack.c.l.b16 %v405
    %v478 = vunpack.c.h.b16 %v405
    %v479 = vunpack.c.l.b16 %v406
    %v480 = vunpack.c.h.b16 %v406
    %v481 = vunpack.c.l.b16 %v407
    %v482 = vunpack.c.h.b16 %v407
    %v483 = vunpack.c.l.b16 %v408
    %v484 = vunpack.c.h.b16 %v408
    %v485 = vunpack.c.l.b16 %v409
    %v486 = vunpack.c.h.b16 %v409
    %v487 = vunpack.c.l.b16 %v410
    %v488 = vunpack.c.h.b16 %v410
    %v489 = vunpack.c.l.b16 %v411
    %v490 = vunpack.c.h.b16 %v411
    %v491 = vunpack.c.l.b16 %v412
    %v492 = vunpack.c.h.b16 %v412
    %v493 = vunpack.c.l.b16 %v413
    %v494 = vunpack.c.h.b16 %v413
    %v495 = vunpack.c.l.b16 %v414
    %v496 = vunpack.c.h.b16 %v414
    %v497 = vunpack.c.l.b16 %v415
    %v498 = vunpack.c.h.b16 %v415
    %v499 = vunpack.c.l.b16 %v416
    %v500 = vunpack.c.h.b16 %v416
    %v501 = vunpack.c.l.b16 %v417
    %v502 = vunpack.c.h.b16 %v417
    %v503 = vunpack.c.l.b16 %v418
    %v504 = vunpack.c.h.b16 %v418
    %v505 = vunpack.c.l.b16 %v419
    %v506 = vunpack.c.h.b16 %v419
    %v507 = vunpack.c.l.b16 %v420
    %v508 = vunpack.c.h.b16 %v420
    %v509 = vunpack.c.l.b16 %v421
    %v510 = vunpack.c.h.b16 %v421
    %v511 = vunpack.c.l.b16 %v422
    %v512 = vunpack.c.h.b16 %v422
    %v513 = vunpack.c.l.b16 %v423
    %v514 = vunpack.c.h.b16 %v423
    %v515 = vunpack.c.l.b16 %v424
    %v516 = vunpack.c.h.b16 %v424
    %v517 = vunpack.c.l.b16 %v425
    %v518 = vunpack.c.h.b16 %v425
    %v519 = vunpack.c.l.b16 %v426
    %v520 = vunpack.c.h.b16 %v426
    %v521 = vunpack.c.l.b16 %v427
    %v522 = vunpack.c.h.b16 %v427
    %v523 = vunpack.c.l.b16 %v428
    %v524 = vunpack.c.h.b16 %v428
    %v525 = vunpack.c.l.b16 %v429
    %v526 = vunpack.c.h.b16 %v429
    %v527 = vunpack.c.l.b16 %v430
    %v528 = vunpack.c.h.b16 %v430
    %v529 = vunpack.c.l.b16 %v431
    %v530 = vunpack.c.h.b16 %v431
    %v531 = vunpack.c.l.b16 %v432
    %v532 = vunpack.c.h.b16 %v432
    %v533 = vunpack.c.l.b16 %v433
    %v534 = vunpack.c.h.b16 %v433
    %v535 = vunpack.c.l.b16 %v434
    %v536 = vunpack.c.h.b16 %v434
    %v537 = vpack.c.b16 %v475, %v473
    %v538 = vpack.c.b16 %v476, %v474
    %v539 = vpack.c.b16 %v479, %v477
    %v540 = vpack.c.b16 %v480, %v478
    %v541 = vpack.c.b16 %v483, %v481
    %v542 = vpack.c.b16 %v484, %v482
    %v543 = vpack.c.b16 %v487, %v485
    %v544 = vpack.c.b16 %v488, %v486
    %v545 = vpack.c.b16 %v491, %v489
    %v546 = vpack.c.b16 %v492, %v490
    %v547 = vpack.c.b16 %v495, %v493
    %v548 = vpack.c.b16 %v496, %v494
    %v549 = vpack.c.b16 %v499, %v497
    %v550 = vpack.c.b16 %v500, %v498
    %v551 = vpack.c.b16 %v503, %v501
    %v552 = vpack.c.b16 %v504, %v502
    %v553 = vpack.c.b16 %v507, %v505
    %v554 = vpack.c.b16 %v508, %v506
    %v555 = vpack.c.b16 %v511, %v509
    %v556 = vpack.c.b16 %v512, %v510
    %v557 = vpack.c.b16 %v515, %v513
    %v558 = vpack.c.b16 %v516, %v514
    %v559 = vpack.c.b16 %v519, %v517
    %v560 = vpack.c.b16 %v520, %v518
    %v561 = vpack.c.b16 %v523, %v521
    %v562 = vpack.c.b16 %v524, %v522
    %v563 = vpack.c.b16 %v527, %v525
    %v564 = vpack.c.b16 %v528, %v526
    %v565 = vpack.c.b16 %v531, %v529
    %v566 = vpack.c.b16 %v532, %v530
    %v567 = vpack.c.b16 %v535, %v533
    %v568 = vpack.c.b16 %v536, %v534
    %601 = vmatpush.bf16.msra.mxu0 %v551
    %602 = vmatpush.bf16.msra.mxu0 %v549
    %603 = vmatpush.bf16.msra.mxu0 %v547
    %604 = vmatpush.bf16.msra.mxu0 %v545
    %605 = vmatpush.bf16.msra.mxu0 %v543
    %606 = vmatpush.bf16.msra.mxu0 %v541
    %607 = vmatpush.bf16.msra.mxu0 %v539
    %608 = vmatpush.bf16.msra.mxu0 %v537
    %609 = vmatmul.bf16.gmra.mxu0 %v401
    %v610 = vpop.f32.mrf.mxu0
    %v611 = vadd.f32 %v437, %v610
    %v612 = vpop.f32.mrf.mxu0
    %613 = vdwg.mxu0
    %614 = vmatpush.bf16.msra.mxu0 %v567
    %615 = vmatpush.bf16.msra.mxu0 %v565
    %616 = vmatpush.bf16.msra.mxu0 %v563
    %617 = vmatpush.bf16.msra.mxu0 %v561
    %618 = vmatpush.bf16.msra.mxu0 %v559
    %619 = vmatpush.bf16.msra.mxu0 %v557
    %620 = vmatpush.bf16.msra.mxu0 %v555
    %621 = vmatpush.bf16.msra.mxu0 %v553
    %622 = vmatmul.bf16.gmra.mxu0 %v402
    %v623 = vpop.f32.mrf.mxu0
    %v624 = vadd.f32 %v611, %v623
    %v625 = vpop.f32.mrf.mxu0
    %626 = vdwg.mxu0
    %627 = vmatpush.bf16.msra.mxu0 %v552
    %628 = vmatpush.bf16.msra.mxu0 %v550
    %629 = vmatpush.bf16.msra.mxu0 %v548
    %630 = vmatpush.bf16.msra.mxu0 %v546
    %631 = vmatpush.bf16.msra.mxu0 %v544
    %632 = vmatpush.bf16.msra.mxu0 %v542
    %633 = vmatpush.bf16.msra.mxu0 %v540
    %634 = vmatpush.bf16.msra.mxu0 %v538
    %635 = vmatmul.bf16.gmra.mxu0 %v401
    %v636 = vpop.f32.mrf.mxu0
    %v637 = vadd.f32 %v438, %v636
    %v638 = vpop.f32.mrf.mxu0
    %639 = vdwg.mxu0
    %640 = vmatpush.bf16.msra.mxu0 %v568
    %641 = vmatpush.bf16.msra.mxu0 %v566
    %642 = vmatpush.bf16.msra.mxu0 %v564
    %643 = vmatpush.bf16.msra.mxu0 %v562
    %644 = vmatpush.bf16.msra.mxu0 %v560
    %645 = vmatpush.bf16.msra.mxu0 %v558
    %646 = vmatpush.bf16.msra.mxu0 %v556
    %647 = vmatpush.bf16.msra.mxu0 %v554
    %648 = vmatmul.bf16.gmra.mxu0 %v402
    %v649 = vpop.f32.mrf.mxu0
    %v650 = vadd.f32 %v637, %v649
    %v651 = vpop.f32.mrf.mxu0
    %652 = vdwg.mxu0
    %v653 = vtanh.pop %v624
    %v654 = vmax.f32 %v650, 0.0
    %v655 = vand.u32 2147483647, %v650
    %v656 = vsub.f32 0.0, %v655
    %v657 = vmul.f32 %v656, 1.442695
    %v658 = vpow.pop %v657
    %v659 = vadd.f32 %v658, 1.0
    %v660 = vlog2.pop %v659
    %v661 = vmul.f32 %v660, 0.6931472
    %v662 = vmul.f32 -0.5, %v658
    %v663 = vadd.f32 %v662, 1.0
    %v664 = vmul.f32 %v663, %v658
    %v665 = vand.u32 2147483647, %v658
    %vm666 = vcmp.lt.f32.partialorder %v665, 0.0004427343
    %v667 = vsel %vm666, %v664, %v661
    %v668 = vadd.f32 %v654, %v667
    %v669 = vadd.f32 %v668, 0.001
    %v670 = vmul.f32 %v669, %v85
    %v671 = vadd.f32 %v653, %v670
    %v672 = vmax.f32 %v671, -1.0
    %v673 = vmin.f32 %v672, 1.0
    %vm674 = vcmask 31744
    %675 = vst.msk [vmem:[%s6] sm:$0xff] %vm674, %v673
    // Predicated region
    $region42: #{tpu_custom_call.1} parent=1 // pred_check
      _
    $region43: #{tpu_custom_call.1} parent=1 // pred_check_branch
      %677 = sbr.rel (0) target = $region45
    $region44: #{tpu_custom_call.1} parent=1 // pred_region
      _
    $region45: #{tpu_custom_call.1} parent=1 // pred_fallthru
      _
    // Predicated region
    $region46: #{tpu_custom_call.1} parent=1 // pred_check
      _
    $region47: #{tpu_custom_call.1} parent=1 // pred_check_branch
      %679 = sbr.rel (0) target = $region49
    $region48: #{tpu_custom_call.1} parent=1 // pred_region
      _
    $region49: #{tpu_custom_call.1} parent=1 // pred_fallthru
      _
    %680 = vsyncpa [#allocation3], 1
    %681 = vsyncpa [#allocation5], 1
    %682 = vsyncpa [#allocation8], 1

</llo_original>
